<compile_context>
chip_gen: v7x
topology: tpu7x:2x2x1
jax: 0.10.0
libtpu: 0.0.40
codegen_flags: <defaults>
</compile_context>

<pallas_src>
import functools
import math

import numpy as np
import jax
import jax.numpy as jnp
from jax import lax
from jax.experimental import pallas as pl
from jax.experimental.pallas import tpu as pltpu

_EPS = 1e-5
_MAX_PACKED_LANES = 512          # widest packed row (multiple of 128)


def _tpu_vmem_capacity_bytes():
    try:
        cap = getattr(pltpu.get_tpu_info(), "vmem_capacity_bytes", None)
        if cap:
            return int(cap)
    except Exception:
        pass
    return 128 * 1024 * 1024


_VMEM_CAP = _tpu_vmem_capacity_bytes()
if _VMEM_CAP <= 64 * 1024 * 1024:
    # v7x-class: 64 MiB physical VMEM per TC -> smaller tiles, tighter scoped limit.
    _TARGET_BLOCK_BYTES = 2 * 1024 * 1024
    _VMEM_LIMIT_BYTES = 40 * 1024 * 1024
else:
    # v5e / v6e: 128 MiB physical VMEM.
    _TARGET_BLOCK_BYTES = 4 * 1024 * 1024
    _VMEM_LIMIT_BYTES = 64 * 1024 * 1024


def _round_up(n, m):
    return ((n + m - 1) // m) * m


def _pick_rows(total_rows, row_bytes, itemsize):
    """Rows per x block.

    * ~_TARGET_BLOCK_BYTES of x per tile,
    * multiple of the dtype's sublane packing (8 for f32, 16 for bf16, 32 for i8),
    * capped so the 1-D parallel grid has >= 4 steps when there is enough work
      (>= 2 steps per TensorCore on v7x so each core can still double-buffer).
    """
    sub = max(8, 32 // max(itemsize, 1))
    tm = max(sub, (_TARGET_BLOCK_BYTES // max(row_bytes, 1)) // sub * sub)
    quarter = _round_up(pl.cdiv(total_rows, 4), sub)
    tm = min(tm, max(sub, quarter))
    if tm >= total_rows:
        return total_rows            # single full-extent block (always layout-legal)
    return tm


def _compiler_params():
    return pltpu.CompilerParams(
        dimension_semantics=("parallel",),
        vmem_limit_bytes=_VMEM_LIMIT_BYTES,
    )


def _cost(rows, cols, itemsize):
    # Memory-bound kernel: 1 read + 1 write of x dominates.
    return pl.CostEstimate(
        flops=8 * rows * cols,
        transcendentals=rows,
        bytes_accessed=2 * rows * cols * itemsize + 2 * cols * 4,
    )


def _ln_rows_kernel(x_ref, w_ref, b_ref, o_ref):
    """General path: one token per row. x_ref: (tm, C), w/b: (1, C).

    NOTE: the tail grid block may read rows past the end of the array; stats on
    those rows can be garbage, but Pallas masks the out-of-bounds writeback, so
    only in-range rows ever reach HBM.  Do not remove that assumption.
    """
    x = x_ref[...].astype(jnp.float32)
    inv_c = 1.0 / x.shape[-1]
    mean = jnp.sum(x, axis=-1, keepdims=True) * inv_c
    xc = x - mean
    var = jnp.sum(xc * xc, axis=-1, keepdims=True) * inv_c    # two-pass, >= 0
    inv = lax.rsqrt(var + _EPS)
    o_ref[...] = (xc * inv * w_ref[...] + b_ref[...]).astype(o_ref.dtype)


def _ln_packed_kernel(x_ref, w_ref, b_ref, sum_ref, bcast_ref, o_ref, *, c):
    """Lane-dense path for C not a multiple of 128: each row holds g = lanes // c tokens.

    x_ref: (tm, g*c); w_ref/b_ref: (1, g*c) (weight/bias tiled g times).
    sum_ref: (g*c, g) one-hot segment matrix; bcast_ref: (g, g*c) its transpose.
    Per-token reductions / broadcasts are tiny matmuls on the otherwise-idle MXU,
    so all vld/vst and VPU work stay on full 128-lane vregs (no masked stores).
    """
    x = x_ref[...].astype(jnp.float32)
    seg_sum = sum_ref[...]
    seg_bcast = bcast_ref[...]
    inv_c = 1.0 / c
    mean = jnp.dot(x, seg_sum, preferred_element_type=jnp.float32) * inv_c       # (tm, g)
    xc = x - jnp.dot(mean, seg_bcast, preferred_element_type=jnp.float32)        # (tm, g*c)
    var = jnp.dot(xc * xc, seg_sum, preferred_element_type=jnp.float32) * inv_c  # >= 0
    inv = lax.rsqrt(var + _EPS)
    inv_b = jnp.dot(inv, seg_bcast, preferred_element_type=jnp.float32)
    o_ref[...] = (xc * inv_b * w_ref[...] + b_ref[...]).astype(o_ref.dtype)


def _launch_rows(x2d, w2d, b2d, tm, out_dtype):
    rows, cols = x2d.shape
    itemsize = jnp.dtype(x2d.dtype).itemsize
    return pl.pallas_call(
        _ln_rows_kernel,
        out_shape=jax.ShapeDtypeStruct((rows, cols), out_dtype),
        grid_spec=pltpu.PrefetchScalarGridSpec(
            num_scalar_prefetch=0,
            grid=(pl.cdiv(rows, tm),),
            in_specs=[
                pl.BlockSpec((tm, cols), lambda i: (i, 0)),
                pl.BlockSpec((1, cols), lambda i: (0, 0)),
                pl.BlockSpec((1, cols), lambda i: (0, 0)),
            ],
            out_specs=pl.BlockSpec((tm, cols), lambda i: (i, 0)),
        ),
        compiler_params=_compiler_params(),
        cost_estimate=_cost(rows, cols, itemsize),
    )(x2d, w2d, b2d)


def _launch_packed(xp, wp, bp, seg_sum, seg_bcast, tm, c, out_dtype):
    rows, lanes = xp.shape
    itemsize = jnp.dtype(xp.dtype).itemsize
    g = lanes // c
    kernel = functools.partial(_ln_packed_kernel, c=c)
    return pl.pallas_call(
        kernel,
        out_shape=jax.ShapeDtypeStruct((rows, lanes), out_dtype),
        grid_spec=pltpu.PrefetchScalarGridSpec(
            num_scalar_prefetch=0,
            grid=(pl.cdiv(rows, tm),),
            in_specs=[
                pl.BlockSpec((tm, lanes), lambda i: (i, 0)),
                pl.BlockSpec((1, lanes), lambda i: (0, 0)),
                pl.BlockSpec((1, lanes), lambda i: (0, 0)),
                pl.BlockSpec((lanes, g), lambda i: (0, 0)),   # invariant -> not re-DMA'd
                pl.BlockSpec((g, lanes), lambda i: (0, 0)),
            ],
            out_specs=pl.BlockSpec((tm, lanes), lambda i: (i, 0)),
        ),
        compiler_params=_compiler_params(),
        cost_estimate=_cost(rows, lanes, itemsize),
    )(xp, wp, bp, seg_sum, seg_bcast)


@jax.jit
def withbias_layernorm(x, weight, bias):
    """x: (..., C), weight/bias: (C,). Returns same shape/dtype as x."""
    orig_shape = x.shape
    C = orig_shape[-1]
    x2d = x.reshape(-1, C)
    R = x2d.shape[0]
    itemsize = jnp.dtype(x.dtype).itemsize

    w32 = weight.astype(jnp.float32).reshape(1, C)
    b32 = bias.astype(jnp.float32).reshape(1, C)

    # ---- lane-dense packed path --------------------------------------------------
    # When C is not a multiple of 128 a (R, C) layout forces masked/partial vst on
    # the output (biggest measured store-side penalty).  Pack G = lanes // C
    # consecutive tokens into one lanes = lcm(C, 128)-lane row (widened up to
    # _MAX_PACKED_LANES), so every vld/vst is full width.
    base_lanes = (C * 128) // math.gcd(C, 128)            # lcm(C, 128)
    if C % 128 != 0 and base_lanes <= _MAX_PACKED_LANES:
        lanes = base_lanes
        while lanes * 2 <= _MAX_PACKED_LANES:
            lanes *= 2
        G = lanes // C

        pad = (-R) % G
        xr = x2d
        if pad:
            # Materializes a padded copy in XLA, but only when R % G != 0; still far
            # cheaper than running 1/G-lane-occupancy masked stores on all of x.
            xr = jnp.pad(x2d, ((0, pad), (0, 0)))
        Rp = (R + pad) // G
        xp = xr.reshape(Rp, lanes)                          # free contiguous reshape
        wp = jnp.tile(w32, (1, G))
        bp = jnp.tile(b32, (1, G))

        # One-hot segment matrices built once on the host (constants), not rebuilt
        # with iota/compare/cast on every serial grid step inside the kernel.
        lane_seg = np.arange(lanes) // C
        seg_sum_np = (lane_seg[:, None] == np.arange(G)[None, :]).astype(np.float32)
        seg_sum = jnp.asarray(seg_sum_np)                   # (lanes, G)
        seg_bcast = jnp.asarray(np.ascontiguousarray(seg_sum_np.T))   # (G, lanes)

        tm = _pick_rows(Rp, lanes * itemsize, itemsize)
        out = _launch_packed(xp, wp, bp, seg_sum, seg_bcast, tm, C, x.dtype)
        out = out.reshape(Rp * G, C)
        if pad:
            out = out[:R]
        return out.reshape(orig_shape)

    # ---- general path (C multiple of 128, or too wide to pack) --------------------
    # TODO(synk): add a column-tiled two-pass fallback for pathological C where even
    # an 8-row tile would exceed the scoped VMEM limit (C in the hundreds of thousands).
    tm = _pick_rows(R, C * itemsize, itemsize)
    out = _launch_rows(x2d, w32, b32, tm, x.dtype)
    return out.reshape(orig_shape)


def _reference(x, weight, bias):
    x32 = x.astype(jnp.float32)
    mu = jnp.mean(x32, axis=-1, keepdims=True)
    var = jnp.var(x32, axis=-1, keepdims=True)              # ddof=0 == unbiased=False
    y = (x32 - mu) / jnp.sqrt(var + _EPS) * weight.astype(jnp.float32) \
        + bias.astype(jnp.float32)
    return y.astype(x.dtype)


if __name__ == "__main__":
    key = jax.random.PRNGKey(0)
    k1, k2, k3, k4, k5 = jax.random.split(key, 5)

    # eamri applies this layernorm to NCHW feature maps rearranged to (B, H*W, C).
    B, H, W, C = 2, 16, 16, 32
    x = jax.random.normal(k1, (B, H * W, C), dtype=jnp.float32)
    weight = 1.0 + 0.1 * jax.random.normal(k2, (C,), dtype=jnp.float32)
    bias = 0.1 * jax.random.normal(k3, (C,), dtype=jnp.float32)

    out = jax.block_until_ready(withbias_layernorm(x, weight, bias))
    ref = _reference(x, weight, bias)
    assert out.shape == x.shape and out.dtype == x.dtype
    assert jnp.allclose(out, ref, atol=2e-4, rtol=2e-4), \
        float(jnp.max(jnp.abs(out - ref)))

    # lcm-packed path with padding: C=96 (384-lane rows, G=4) and a token count
    # that is not a multiple of G (exercises pad + slice).
    C2 = 96
    x2 = jax.random.normal(k4, (3, 7, C2), dtype=jnp.float32)
    w2 = 1.0 + 0.05 * jax.random.normal(k2, (C2,), dtype=jnp.float32)
    b2 = 0.05 * jax.random.normal(k3, (C2,), dtype=jnp.float32)
    out2 = jax.block_until_ready(withbias_layernorm(x2, w2, b2))
    ref2 = _reference(x2, w2, b2)
    assert jnp.allclose(out2, ref2, atol=2e-4, rtol=2e-4)

    # General row-tiled path: C multiple of 128, token count not a multiple of the
    # row tile (exercises the cdiv grid + masked tail writeback).
    C3 = 128
    x3 = jax.random.normal(k5, (4, 5, C3), dtype=jnp.float32)
    w3 = jnp.ones((C3,), dtype=jnp.float32)
    b3 = jnp.zeros((C3,), dtype=jnp.float32)
    out3 = jax.block_until_ready(withbias_layernorm(x3, w3, b3))
    ref3 = _reference(x3, w3, b3)
    assert jnp.allclose(out3, ref3, atol=2e-4, rtol=2e-4)

    print("KERNEL_OK")
</pallas_src>

<mosaic_0001>
module attributes {stable_mosaic.version = 11 : i64} {
  func.func @_ln_packed_kernel(%arg0: i32, %arg1: memref<8x512xf32, #tpu.memory_space<vmem>>, %arg2: memref<1x512xf32, #tpu.memory_space<vmem>>, %arg3: memref<1x512xf32, #tpu.memory_space<vmem>>, %arg4: memref<512x16xf32, #tpu.memory_space<vmem>>, %arg5: memref<16x512xf32, #tpu.memory_space<vmem>>, %arg6: memref<8x512xf32, #tpu.memory_space<vmem>>) attributes {dimension_semantics = [#tpu.dimension_semantics<parallel>], iteration_bounds = array<i64: 4>, scalar_prefetch = 0 : i64, scratch_operands = 0 : i64, tpu.core_type = #tpu.core_type<tc>, window_params = [{transform_indices = @transform_0, window_bounds = array<i64: 8, 512>}, {pipeline_mode = #tpu.pipeline_mode<synchronous>, transform_indices = @transform_1, window_bounds = array<i64: 1, 512>}, {pipeline_mode = #tpu.pipeline_mode<synchronous>, transform_indices = @transform_2, window_bounds = array<i64: 1, 512>}, {pipeline_mode = #tpu.pipeline_mode<synchronous>, transform_indices = @transform_3, window_bounds = array<i64: 512, 16>}, {pipeline_mode = #tpu.pipeline_mode<synchronous>, transform_indices = @transform_4, window_bounds = array<i64: 16, 512>}, {transform_indices = @transform_5, window_bounds = array<i64: 8, 512>}]} {
    %c0 = arith.constant 0 : index
    %c0_0 = arith.constant 0 : index
    %0 = vector.load %arg1[%c0, %c0_0] : memref<8x512xf32, #tpu.memory_space<vmem>>, vector<8x512xf32>
    %c0_1 = arith.constant 0 : index
    %c0_2 = arith.constant 0 : index
    %1 = vector.load %arg4[%c0_1, %c0_2] : memref<512x16xf32, #tpu.memory_space<vmem>>, vector<512x16xf32>
    %c0_3 = arith.constant 0 : index
    %c0_4 = arith.constant 0 : index
    %2 = vector.load %arg5[%c0_3, %c0_4] : memref<16x512xf32, #tpu.memory_space<vmem>>, vector<16x512xf32>
    %cst = arith.constant dense<0.000000e+00> : vector<8x16xf32>
    %3 = tpu.matmul %0, %1, %cst {dimension_numbers = #tpu.dot_dimension_numbers<[1], [0], [0], [1], [0, 0, 1, 1], [], []>} : vector<8x512xf32>, vector<512x16xf32>, vector<8x16xf32> -> vector<8x16xf32>
    %cst_5 = arith.constant 3.125000e-02 : f32
    %4 = vector.broadcast %cst_5 : f32 to vector<8x16xf32>
    %5 = arith.mulf %3, %4 : vector<8x16xf32>
    %cst_6 = arith.constant dense<0.000000e+00> : vector<8x512xf32>
    %6 = tpu.matmul %5, %2, %cst_6 {dimension_numbers = #tpu.dot_dimension_numbers<[1], [0], [0], [1], [0, 0, 1, 1], [], []>} : vector<8x16xf32>, vector<16x512xf32>, vector<8x512xf32> -> vector<8x512xf32>
    %7 = arith.subf %0, %6 : vector<8x512xf32>
    %8 = arith.mulf %7, %7 : vector<8x512xf32>
    %cst_7 = arith.constant dense<0.000000e+00> : vector<8x16xf32>
    %9 = tpu.matmul %8, %1, %cst_7 {dimension_numbers = #tpu.dot_dimension_numbers<[1], [0], [0], [1], [0, 0, 1, 1], [], []>} : vector<8x512xf32>, vector<512x16xf32>, vector<8x16xf32> -> vector<8x16xf32>
    %cst_8 = arith.constant 3.125000e-02 : f32
    %10 = vector.broadcast %cst_8 : f32 to vector<8x16xf32>
    %11 = arith.mulf %9, %10 : vector<8x16xf32>
    %cst_9 = arith.constant 9.99999974E-6 : f32
    %12 = vector.broadcast %cst_9 : f32 to vector<8x16xf32>
    %13 = arith.addf %11, %12 : vector<8x16xf32>
    %14 = math.rsqrt %13 : vector<8x16xf32>
    %cst_10 = arith.constant dense<0.000000e+00> : vector<8x512xf32>
    %15 = tpu.matmul %14, %2, %cst_10 {dimension_numbers = #tpu.dot_dimension_numbers<[1], [0], [0], [1], [0, 0, 1, 1], [], []>} : vector<8x16xf32>, vector<16x512xf32>, vector<8x512xf32> -> vector<8x512xf32>
    %16 = arith.mulf %7, %15 : vector<8x512xf32>
    %c0_11 = arith.constant 0 : index
    %c0_12 = arith.constant 0 : index
    %17 = vector.load %arg2[%c0_11, %c0_12] : memref<1x512xf32, #tpu.memory_space<vmem>>, vector<1x512xf32>
    %18 = vector.broadcast %17 : vector<1x512xf32> to vector<8x512xf32>
    %19 = arith.mulf %16, %18 : vector<8x512xf32>
    %c0_13 = arith.constant 0 : index
    %c0_14 = arith.constant 0 : index
    %20 = vector.load %arg3[%c0_13, %c0_14] : memref<1x512xf32, #tpu.memory_space<vmem>>, vector<1x512xf32>
    %21 = vector.broadcast %20 : vector<1x512xf32> to vector<8x512xf32>
    %22 = arith.addf %19, %21 : vector<8x512xf32>
    %c0_15 = arith.constant 0 : index
    %c0_16 = arith.constant 0 : index
    %23 = vector.load %arg6[%c0_15, %c0_16] : memref<8x512xf32, #tpu.memory_space<vmem>>, vector<8x512xf32>
    tpu.vector_store %arg6[%c0_15, %c0_16], %22 {strides = array<i32>} : memref<8x512xf32, #tpu.memory_space<vmem>>, vector<8x512xf32>,
    return
  }
  func.func @transform_0(%arg0: i32) -> (i32, i32) {
    %c0_i32 = arith.constant 0 : i32
    %c0_i32_0 = arith.constant 0 : i32
    return %arg0, %c0_i32 : i32, i32
  }
  func.func @transform_1(%arg0: i32) -> (i32, i32) {
    %c0_i32 = arith.constant 0 : i32
    %c0_i32_0 = arith.constant 0 : i32
    %c0_i32_1 = arith.constant 0 : i32
    return %c0_i32, %c0_i32_0 : i32, i32
  }
  func.func @transform_2(%arg0: i32) -> (i32, i32) {
    %c0_i32 = arith.constant 0 : i32
    %c0_i32_0 = arith.constant 0 : i32
    %c0_i32_1 = arith.constant 0 : i32
    return %c0_i32, %c0_i32_0 : i32, i32
  }
  func.func @transform_3(%arg0: i32) -> (i32, i32) {
    %c0_i32 = arith.constant 0 : i32
    %c0_i32_0 = arith.constant 0 : i32
    %c0_i32_1 = arith.constant 0 : i32
    return %c0_i32, %c0_i32_0 : i32, i32
  }
  func.func @transform_4(%arg0: i32) -> (i32, i32) {
    %c0_i32 = arith.constant 0 : i32
    %c0_i32_0 = arith.constant 0 : i32
    %c0_i32_1 = arith.constant 0 : i32
    return %c0_i32, %c0_i32_0 : i32, i32
  }
  func.func @transform_5(%arg0: i32) -> (i32, i32) {
    %c0_i32 = arith.constant 0 : i32
    %c0_i32_0 = arith.constant 0 : i32
    return %arg0, %c0_i32 : i32, i32
  }
}

</mosaic_0001>

<llo_original>
// kernel: withbias_layernorm.1
$region0: #{withbias_layernorm.1}
  #allocation0 [shape = 'u32[]', space=smem, size = 0x4, offset = 0x4, fixed_abs, tag = 'smem constant byte address 0x4 - core index']
  #allocation1 [shape = 'u32[144,128]{1,0:T(1,128)}', space=vmem, size = 0x12000, scoped, tag = 'internal scratch']
  %s0 = inlined_call_operand.hbm [shape: f32[32,512], index: 0, kind: input, shape index: {}]
  %s1 = inlined_call_operand.hbm [shape: f32[1,512], index: 1, kind: input, shape index: {}]
  %s2 = inlined_call_operand.hbm [shape: f32[1,512], index: 2, kind: input, shape index: {}]
  %s3 = inlined_call_operand.hbm [shape: f32[512,16], index: 3, kind: input, shape index: {}]
  %s4 = inlined_call_operand.hbm [shape: f32[16,512], index: 4, kind: input, shape index: {}]
  %s5 = inlined_call_operand.hbm [shape: f32[32,512], index: 5, kind: output, shape index: {}]
  %s6 = sld [smem:[#allocation0]]
  $region73: #{withbias_layernorm.1} parent=0
    _
  %s8 = ssub.s32 1, %s6
  %s9 = scalar_select 0, %s8, %s6
  $region1: #{withbias_layernorm.1} parent=0
    #allocation2 [shape = 'u8[32768]{0}', space=vmem, size = 0x8000, scoped, tag = 'input window, operand 0']
    #allocation3 [shape = 's32[2]{0}', space=sflag, size = 0x8, scoped, tag = 'scoped memory for withbias_layernorm.1']
    #allocation4 [shape = 's32[2]{0}', space=sflag, size = 0x8, scoped, tag = 'scoped memory for withbias_layernorm.1']
    #allocation5 [shape = 'u8[2048]{0}', space=vmem, size = 0x800, scoped, tag = 'input window, operand 1, single buffered']
    #allocation6 [shape = 's32[1]{0}', space=sflag, size = 0x4, scoped, tag = 'scoped memory for withbias_layernorm.1']
    #allocation7 [shape = 'u8[2048]{0}', space=vmem, size = 0x800, scoped, tag = 'input window, operand 2, single buffered']
    #allocation8 [shape = 'u8[262144]{0}', space=vmem, size = 0x40000, scoped, tag = 'input window, operand 3, single buffered']
    #allocation9 [shape = 's32[1]{0}', space=sflag, size = 0x4, scoped, tag = 'scoped memory for withbias_layernorm.1']
    #allocation10 [shape = 'u8[32768]{0}', space=vmem, size = 0x8000, scoped, tag = 'input window, operand 4, single buffered']
    #allocation11 [shape = 'u8[32768]{0}', space=vmem, size = 0x8000, scoped, tag = 'output window, operand 0']
    %10 = vsyncpa [#allocation3], 0
    %s11 = scalar_lea.sflag [#allocation3], 1
    %12 = vsyncpa %s11, 0
    %13 = vsyncpa [#allocation6], 0
    %14 = vsyncpa [#allocation9], 0
    %15 = vsyncpa [#allocation4], 0
    %s16 = scalar_lea.sflag [#allocation4], 1
    %17 = vsyncpa %s16, 0
    loop: start=0, step=1, limit=6
    $region2: #{withbias_layernorm.1} parent=1 // loop_pre_header
      _
    $region3: #{withbias_layernorm.1} parent=1 // loop_header
      %s19 = sphi 0, %s23
      %p20 = scmp.ge.s32.totalorder %s19, 6
      %s29 = sphi 0, %s31
      %s32 = sphi 0, %s29
      %s33 = sphi 0, %s32
      %s49 = sphi 0, %s33
      %s53 = sphi 0, %s53
      %s55 = sphi 0, %s53
      %s56 = sphi 0, %s55
      %s70 = sphi 0, %s56
      %s74 = sphi 0, %s74
      %s76 = sphi 0, %s74
      %s77 = sphi 0, %s76
      %s91 = sphi 0, %s77
      %s95 = sphi 0, %s95
      %s97 = sphi 0, %s95
      %s98 = sphi 0, %s97
      %s112 = sphi 0, %s98
      %s116 = sphi 0, %s116
      %s118 = sphi 0, %s116
      %s119 = sphi 0, %s118
      %s133 = sphi 0, %s119
      %s139 = sphi 0, %s141
      %s142 = sphi 0, %s139
      %s143 = sphi 0, %s142
      %s159 = sphi 0, %s143
    $region4: #{withbias_layernorm.1} parent=1 // loop_header_branch
      %22 = sbr.rel (%p20) target = $region8
    $region5: #{withbias_layernorm.1} parent=1 // loop_body
      %s24 = ssub.s32 %s19, 1
      %s25 = ssub.s32 %s19, 2
      %s26 = sadd.s32 %s19, 1
      %s27 = ssub.s32 %s19, %s26
      %p28 = scmp.eq.s32.totalorder %s27, 0
      %s30 = sadd.s32 %s29, 1
      %s31 = scalar_select %p28, %s29, %s30
      %p34 = pneg %p28
      %p35 = scmp.eq.s32.totalorder %s19, 3
      %p36 = por %p34, %p35
      %p37 = scmp.ne.s32.totalorder %s29, %s32
      %p38 = scmp.eq.s32.totalorder %s19, 0
      %p39 = por %p37, %p38
      %p40 = scmp.ne.s32.totalorder %s29, %s32
      %p41 = scmp.eq.s32.totalorder %s24, 3
      %p42 = por %p40, %p41
      %p43 = scmp.ne.s32.totalorder %s32, %s33
      %p44 = scmp.eq.s32.totalorder %s24, 0
      %p45 = por %p43, %p44
      %p46 = scmp.ne.s32.totalorder %s32, %s33
      %p47 = scmp.eq.s32.totalorder %s25, 3
      %p48 = por %p46, %p47
      %p50 = scmp.ne.s32.totalorder %s33, %s49
      %p51 = scmp.eq.s32.totalorder %s25, 0
      %p52 = por %p50, %p51
      %s54 = sadd.s32 %s53, 1
      %p57 = scmp.eq.s32.totalorder %s19, 3
      %p58 = scmp.ne.s32.totalorder %s53, %s55
      %p59 = scmp.eq.s32.totalorder %s19, 0
      %p60 = por %p58, %p59
      %p61 = scmp.ne.s32.totalorder %s53, %s55
      %p62 = scmp.eq.s32.totalorder %s24, 3
      %p63 = por %p61, %p62
      %p64 = scmp.ne.s32.totalorder %s55, %s56
      %p65 = scmp.eq.s32.totalorder %s24, 0
      %p66 = por %p64, %p65
      %p67 = scmp.ne.s32.totalorder %s55, %s56
      %p68 = scmp.eq.s32.totalorder %s25, 3
      %p69 = por %p67, %p68
      %p71 = scmp.ne.s32.totalorder %s56, %s70
      %p72 = scmp.eq.s32.totalorder %s25, 0
      %p73 = por %p71, %p72
      %s75 = sadd.s32 %s74, 1
      %p78 = scmp.eq.s32.totalorder %s19, 3
      %p79 = scmp.ne.s32.totalorder %s74, %s76
      %p80 = scmp.eq.s32.totalorder %s19, 0
      %p81 = por %p79, %p80
      %p82 = scmp.ne.s32.totalorder %s74, %s76
      %p83 = scmp.eq.s32.totalorder %s24, 3
      %p84 = por %p82, %p83
      %p85 = scmp.ne.s32.totalorder %s76, %s77
      %p86 = scmp.eq.s32.totalorder %s24, 0
      %p87 = por %p85, %p86
      %p88 = scmp.ne.s32.totalorder %s76, %s77
      %p89 = scmp.eq.s32.totalorder %s25, 3
      %p90 = por %p88, %p89
      %p92 = scmp.ne.s32.totalorder %s77, %s91
      %p93 = scmp.eq.s32.totalorder %s25, 0
      %p94 = por %p92, %p93
      %s96 = sadd.s32 %s95, 1
      %p99 = scmp.eq.s32.totalorder %s19, 3
      %p100 = scmp.ne.s32.totalorder %s95, %s97
      %p101 = scmp.eq.s32.totalorder %s19, 0
      %p102 = por %p100, %p101
      %p103 = scmp.ne.s32.totalorder %s95, %s97
      %p104 = scmp.eq.s32.totalorder %s24, 3
      %p105 = por %p103, %p104
      %p106 = scmp.ne.s32.totalorder %s97, %s98
      %p107 = scmp.eq.s32.totalorder %s24, 0
      %p108 = por %p106, %p107
      %p109 = scmp.ne.s32.totalorder %s97, %s98
      %p110 = scmp.eq.s32.totalorder %s25, 3
      %p111 = por %p109, %p110
      %p113 = scmp.ne.s32.totalorder %s98, %s112
      %p114 = scmp.eq.s32.totalorder %s25, 0
      %p115 = por %p113, %p114
      %s117 = sadd.s32 %s116, 1
      %p120 = scmp.eq.s32.totalorder %s19, 3
      %p121 = scmp.ne.s32.totalorder %s116, %s118
      %p122 = scmp.eq.s32.totalorder %s19, 0
      %p123 = por %p121, %p122
      %p124 = scmp.ne.s32.totalorder %s116, %s118
      %p125 = scmp.eq.s32.totalorder %s24, 3
      %p126 = por %p124, %p125
      %p127 = scmp.ne.s32.totalorder %s118, %s119
      %p128 = scmp.eq.s32.totalorder %s24, 0
      %p129 = por %p127, %p128
      %p130 = scmp.ne.s32.totalorder %s118, %s119
      %p131 = scmp.eq.s32.totalorder %s25, 3
      %p132 = por %p130, %p131
      %p134 = scmp.ne.s32.totalorder %s119, %s133
      %p135 = scmp.eq.s32.totalorder %s25, 0
      %p136 = por %p134, %p135
      %s137 = ssub.s32 %s19, %s26
      %p138 = scmp.eq.s32.totalorder %s137, 0
      %s140 = sadd.s32 %s139, 1
      %s141 = scalar_select %p138, %s139, %s140
      %p144 = pneg %p138
      %p145 = scmp.eq.s32.totalorder %s19, 3
      %p146 = por %p144, %p145
      %p147 = scmp.ne.s32.totalorder %s139, %s142
      %p148 = scmp.eq.s32.totalorder %s19, 0
      %p149 = por %p147, %p148
      %p150 = scmp.ne.s32.totalorder %s139, %s142
      %p151 = scmp.eq.s32.totalorder %s24, 3
      %p152 = por %p150, %p151
      %p153 = scmp.ne.s32.totalorder %s142, %s143
      %p154 = scmp.eq.s32.totalorder %s24, 0
      %p155 = por %p153, %p154
      %p156 = scmp.ne.s32.totalorder %s142, %s143
      %p157 = scmp.eq.s32.totalorder %s25, 3
      %p158 = por %p156, %p157
      %p160 = scmp.ne.s32.totalorder %s143, %s159
      %p161 = scmp.eq.s32.totalorder %s25, 0
      %p162 = por %p160, %p161
      %p163 = scmp.le.s32.totalorder 1, %s19
      %p164 = scmp.lt.s32.totalorder %s19, 5
      %p165 = pnand %p163, %p164
      %p166 = pneg %p165
      // Predicated region
      $region9: #{withbias_layernorm.1} parent=5 // pred_check
        _
      $region10: #{withbias_layernorm.1} parent=5 // pred_check_branch
        %168 = sbr.rel (%p165) target = $region12
      $region11: #{withbias_layernorm.1} parent=5 // pred_region
        %s169 = ssub.s32 %s19, 1
        // Predicated region
        $region13: #{withbias_layernorm.1} parent=11 // pred_check
          %p170 = pneg %p66
        $region14: #{withbias_layernorm.1} parent=11 // pred_check_branch
          %172 = sbr.rel (%p170) target = $region16
        $region15: #{withbias_layernorm.1} parent=11 // pred_region
          %s174 = ssub.s32 64, 64
          %175 = vsyncadd [#allocation6], %s174
          %s177 = sshll.u32 [#allocation5], 4
          %s178 = int_to_ptr.vmem [resolvable:$true] %s177
          %180 = dma.hbm_to_vmem [thread:$0]  %s1, 64, %s178, [#allocation6]
        $region16: #{withbias_layernorm.1} parent=11 // pred_fallthru
          _
        // Predicated region
        $region17: #{withbias_layernorm.1} parent=11 // pred_check
          %p181 = pneg %p87
        $region18: #{withbias_layernorm.1} parent=11 // pred_check_branch
          %183 = sbr.rel (%p181) target = $region20
        $region19: #{withbias_layernorm.1} parent=11 // pred_region
          %s185 = ssub.s32 64, 64
          %186 = vsyncadd [#allocation6], %s185
          %s188 = sshll.u32 [#allocation7], 4
          %s189 = int_to_ptr.vmem [resolvable:$true] %s188
          %191 = dma.hbm_to_vmem [thread:$0]  %s2, 64, %s189, [#allocation6]
        $region20: #{withbias_layernorm.1} parent=11 // pred_fallthru
          _
        // Predicated region
        $region21: #{withbias_layernorm.1} parent=11 // pred_check
          %p192 = pneg %p108
        $region22: #{withbias_layernorm.1} parent=11 // pred_check_branch
          %194 = sbr.rel (%p192) target = $region24
        $region23: #{withbias_layernorm.1} parent=11 // pred_region
          %s196 = ssub.s32 8192, 8192
          %197 = vsyncadd [#allocation9], %s196
          %s198 = sshll.u32 [#allocation8], 4
          %s199 = int_to_ptr.vmem [resolvable:$true] %s198
          %204 = dma.hbm_to_vmem [thread:$0]  %s3, 8192, %s199, [#allocation9], 128, 128, 8
        $region24: #{withbias_layernorm.1} parent=11 // pred_fallthru
          _
        // Predicated region
        $region25: #{withbias_layernorm.1} parent=11 // pred_check
          %p205 = pneg %p129
        $region26: #{withbias_layernorm.1} parent=11 // pred_check_branch
          %207 = sbr.rel (%p205) target = $region28
        $region27: #{withbias_layernorm.1} parent=11 // pred_region
          %s209 = ssub.s32 1024, 1024
          %210 = vsyncadd [#allocation9], %s209
          %s211 = sshll.u32 [#allocation10], 4
          %s212 = int_to_ptr.vmem [resolvable:$true] %s211
          %217 = dma.hbm_to_vmem [thread:$0]  %s4, 1024, %s212, [#allocation9], 512, 512, 32
        $region28: #{withbias_layernorm.1} parent=11 // pred_fallthru
          _
      $region12: #{withbias_layernorm.1} parent=5 // pred_fallthru
        _
      %p218 = scmp.lt.s32.totalorder %s19, 4
      // Predicated region
      $region29: #{withbias_layernorm.1} parent=5 // pred_check
        %p219 = pneg %p218
      $region30: #{withbias_layernorm.1} parent=5 // pred_check_branch
        %221 = sbr.rel (%p219) target = $region32
      $region31: #{withbias_layernorm.1} parent=5 // pred_region
        // Predicated region
        $region33: #{withbias_layernorm.1} parent=31 // pred_check
          %p222 = pneg %p39
        $region34: #{withbias_layernorm.1} parent=31 // pred_check_branch
          %224 = sbr.rel (%p222) target = $region36
        $region35: #{withbias_layernorm.1} parent=31 // pred_region
          %s225 = sand.u32 %s29, 1
          %s226 = scalar_lea.sflag [#allocation3], %s225
          %s227 = sand.u32 %s29, 1
          %s228 = smul.addr %s227, 32
          %s229 = scalar_lea.vmem [#allocation2], %s228
          %s231 = ssub.s32 512, 512
          %232 = vsyncadd %s226, %s231
          %s233 = smul.addr %s19, 4
          %s234 = smul.addr %s233, 128
          %s235 = scalar_lea.hbm %s0, %s234
          %s237 = sshll.u32 %s229, 4
          %s238 = int_to_ptr.vmem [resolvable:$true] %s237
          %240 = dma.hbm_to_vmem [thread:$0]  %s235, 512, %s238, %s226
        $region36: #{withbias_layernorm.1} parent=31 // pred_fallthru
          _
      $region32: #{withbias_layernorm.1} parent=5 // pred_fallthru
        _
      %p241 = scmp.le.s32.totalorder 1, %s19
      %p242 = scmp.lt.s32.totalorder %s19, 5
      %p243 = pnand %p241, %p242
      %p244 = pneg %p243
      // Predicated region
      $region37: #{withbias_layernorm.1} parent=5 // pred_check
        _
      $region38: #{withbias_layernorm.1} parent=5 // pred_check_branch
        %246 = sbr.rel (%p243) target = $region40
      $region39: #{withbias_layernorm.1} parent=5 // pred_region
        %s247 = ssub.s32 %s19, 1
        %s248 = sand.u32 %s32, 1
        %s249 = scalar_lea.sflag [#allocation3], %s248
        %s250 = sand.u32 %s32, 1
        %s251 = smul.addr %s250, 32
        %s252 = scalar_lea.vmem [#allocation2], %s251
        // Predicated region
        $region41: #{withbias_layernorm.1} parent=39 // pred_check
          %p253 = pneg %p45
        $region42: #{withbias_layernorm.1} parent=39 // pred_check_branch
          %255 = sbr.rel (%p253) target = $region44
        $region43: #{withbias_layernorm.1} parent=39 // pred_region
          %256 = dma.done %s249, 512
        $region44: #{withbias_layernorm.1} parent=39 // pred_fallthru
          _
        // Predicated region
        $region45: #{withbias_layernorm.1} parent=39 // pred_check
          %p257 = pneg %p66
        $region46: #{withbias_layernorm.1} parent=39 // pred_check_branch
          %259 = sbr.rel (%p257) target = $region48
        $region47: #{withbias_layernorm.1} parent=39 // pred_region
          %260 = dma.done [#allocation6], 64
        $region48: #{withbias_layernorm.1} parent=39 // pred_fallthru
          _
        // Predicated region
        $region49: #{withbias_layernorm.1} parent=39 // pred_check
          %p261 = pneg %p87
        $region50: #{withbias_layernorm.1} parent=39 // pred_check_branch
          %263 = sbr.rel (%p261) target = $region52
        $region51: #{withbias_layernorm.1} parent=39 // pred_region
          %264 = dma.done [#allocation6], 64
        $region52: #{withbias_layernorm.1} parent=39 // pred_fallthru
          _
        // Predicated region
        $region53: #{withbias_layernorm.1} parent=39 // pred_check
          %p265 = pneg %p108
        $region54: #{withbias_layernorm.1} parent=39 // pred_check_branch
          %267 = sbr.rel (%p265) target = $region56
        $region55: #{withbias_layernorm.1} parent=39 // pred_region
          %268 = dma.done [#allocation9], 8192
        $region56: #{withbias_layernorm.1} parent=39 // pred_fallthru
          _
        // Predicated region
        $region57: #{withbias_layernorm.1} parent=39 // pred_check
          %p269 = pneg %p129
        $region58: #{withbias_layernorm.1} parent=39 // pred_check_branch
          %271 = sbr.rel (%p269) target = $region60
        $region59: #{withbias_layernorm.1} parent=39 // pred_region
          %272 = dma.done [#allocation9], 1024
        $region60: #{withbias_layernorm.1} parent=39 // pred_fallthru
          _
        %s273 = sand.u32 %s32, 1
        %s274 = scalar_lea.sflag [#allocation3], %s273
        %s275 = sand.u32 %s32, 1
        %s276 = smul.addr %s275, 32
        %s277 = scalar_lea.vmem [#allocation2], %s276
        %p278 = pneg %p45
        %p279 = pneg %p42
        %p280 = pneg %p66
        %p281 = pneg %p63
        %p282 = pneg %p87
        %p283 = pneg %p84
        %p284 = pneg %p108
        %p285 = pneg %p105
        %p286 = pneg %p129
        %p287 = pneg %p126
        %p288 = pneg %p155
        %p289 = pneg %p152
        %s290 = sand.u32 %s142, 1
        %s291 = scalar_lea.sflag [#allocation4], %s290
        %s292 = sand.u32 %s142, 1
        %s293 = smul.addr %s292, 32
        %s294 = scalar_lea.vmem [#allocation11], %s293
        %v295 = vld [vmem:[%s252] sm:$0xff]
        %v296 = vld [vmem:[%s252 + $0x8] sm:$0xff]
        %v297 = vld [vmem:[%s252 + $0x10] sm:$0xff]
        %v298 = vld [vmem:[%s252 + $0x18] sm:$0xff]
        %v299 = vld [vmem:[#allocation8] sm:$0xff]
        %v300 = vld [vmem:[#allocation8 + $0x8] sm:$0xff]
        %v301 = vld [vmem:[#allocation8 + $0x10] sm:$0xff]
        %v302 = vld [vmem:[#allocation8 + $0x18] sm:$0xff]
        %v303 = vld [vmem:[#allocation8 + $0x20] sm:$0xff]
        %v304 = vld [vmem:[#allocation8 + $0x28] sm:$0xff]
        %v305 = vld [vmem:[#allocation8 + $0x30] sm:$0xff]
        %v306 = vld [vmem:[#allocation8 + $0x38] sm:$0xff]
        %v307 = vld [vmem:[#allocation8 + $0x40] sm:$0xff]
        %v308 = vld [vmem:[#allocation8 + $0x48] sm:$0xff]
        %v309 = vld [vmem:[#allocation8 + $0x50] sm:$0xff]
        %v310 = vld [vmem:[#allocation8 + $0x58] sm:$0xff]
        %v311 = vld [vmem:[#allocation8 + $0x60] sm:$0xff]
        %v312 = vld [vmem:[#allocation8 + $0x68] sm:$0xff]
        %v313 = vld [vmem:[#allocation8 + $0x70] sm:$0xff]
        %v314 = vld [vmem:[#allocation8 + $0x78] sm:$0xff]
        %v315 = vld [vmem:[#allocation8 + $0x80] sm:$0xff]
        %v316 = vld [vmem:[#allocation8 + $0x88] sm:$0xff]
        %v317 = vld [vmem:[#allocation8 + $0x90] sm:$0xff]
        %v318 = vld [vmem:[#allocation8 + $0x98] sm:$0xff]
        %v319 = vld [vmem:[#allocation8 + $0xa0] sm:$0xff]
        %v320 = vld [vmem:[#allocation8 + $0xa8] sm:$0xff]
        %v321 = vld [vmem:[#allocation8 + $0xb0] sm:$0xff]
        %v322 = vld [vmem:[#allocation8 + $0xb8] sm:$0xff]
        %v323 = vld [vmem:[#allocation8 + $0xc0] sm:$0xff]
        %v324 = vld [vmem:[#allocation8 + $0xc8] sm:$0xff]
        %v325 = vld [vmem:[#allocation8 + $0xd0] sm:$0xff]
        %v326 = vld [vmem:[#allocation8 + $0xd8] sm:$0xff]
        %v327 = vld [vmem:[#allocation8 + $0xe0] sm:$0xff]
        %v328 = vld [vmem:[#allocation8 + $0xe8] sm:$0xff]
        %v329 = vld [vmem:[#allocation8 + $0xf0] sm:$0xff]
        %v330 = vld [vmem:[#allocation8 + $0xf8] sm:$0xff]
        %v331 = vld [vmem:[#allocation8 + $0x100] sm:$0xff]
        %v332 = vld [vmem:[#allocation8 + $0x108] sm:$0xff]
        %v333 = vld [vmem:[#allocation8 + $0x110] sm:$0xff]
        %v334 = vld [vmem:[#allocation8 + $0x118] sm:$0xff]
        %v335 = vld [vmem:[#allocation8 + $0x120] sm:$0xff]
        %v336 = vld [vmem:[#allocation8 + $0x128] sm:$0xff]
        %v337 = vld [vmem:[#allocation8 + $0x130] sm:$0xff]
        %v338 = vld [vmem:[#allocation8 + $0x138] sm:$0xff]
        %v339 = vld [vmem:[#allocation8 + $0x140] sm:$0xff]
        %v340 = vld [vmem:[#allocation8 + $0x148] sm:$0xff]
        %v341 = vld [vmem:[#allocation8 + $0x150] sm:$0xff]
        %v342 = vld [vmem:[#allocation8 + $0x158] sm:$0xff]
        %v343 = vld [vmem:[#allocation8 + $0x160] sm:$0xff]
        %v344 = vld [vmem:[#allocation8 + $0x168] sm:$0xff]
        %v345 = vld [vmem:[#allocation8 + $0x170] sm:$0xff]
        %v346 = vld [vmem:[#allocation8 + $0x178] sm:$0xff]
        %v347 = vld [vmem:[#allocation8 + $0x180] sm:$0xff]
        %v348 = vld [vmem:[#allocation8 + $0x188] sm:$0xff]
        %v349 = vld [vmem:[#allocation8 + $0x190] sm:$0xff]
        %v350 = vld [vmem:[#allocation8 + $0x198] sm:$0xff]
        %v351 = vld [vmem:[#allocation8 + $0x1a0] sm:$0xff]
        %v352 = vld [vmem:[#allocation8 + $0x1a8] sm:$0xff]
        %v353 = vld [vmem:[#allocation8 + $0x1b0] sm:$0xff]
        %v354 = vld [vmem:[#allocation8 + $0x1b8] sm:$0xff]
        %v355 = vld [vmem:[#allocation8 + $0x1c0] sm:$0xff]
        %v356 = vld [vmem:[#allocation8 + $0x1c8] sm:$0xff]
        %v357 = vld [vmem:[#allocation8 + $0x1d0] sm:$0xff]
        %v358 = vld [vmem:[#allocation8 + $0x1d8] sm:$0xff]
        %v359 = vld [vmem:[#allocation8 + $0x1e0] sm:$0xff]
        %v360 = vld [vmem:[#allocation8 + $0x1e8] sm:$0xff]
        %v361 = vld [vmem:[#allocation8 + $0x1f0] sm:$0xff]
        %v362 = vld [vmem:[#allocation8 + $0x1f8] sm:$0xff]
        %v363 = vld [vmem:[#allocation10] sm:$0xff]
        %v364 = vld [vmem:[#allocation10 + $0x8] sm:$0xff]
        %v365 = vld [vmem:[#allocation10 + $0x10] sm:$0xff]
        %v366 = vld [vmem:[#allocation10 + $0x18] sm:$0xff]
        %v367 = vld [vmem:[#allocation10 + $0x20] sm:$0xff]
        %v368 = vld [vmem:[#allocation10 + $0x28] sm:$0xff]
        %v369 = vld [vmem:[#allocation10 + $0x30] sm:$0xff]
        %v370 = vld [vmem:[#allocation10 + $0x38] sm:$0xff]
        %371 = vmatprep.subr.mxu0 0.0
        %372 = vmatpush1.msra.mxu0 %v299
        %373 = vmatprep.subr.mxu0 0.0
        %374 = vmatpush1.msra.mxu0 %v300
        %375 = vmatprep.subr.mxu0 0.0
        %376 = vmatpush1.msra.mxu0 %v301
        %377 = vmatprep.subr.mxu0 0.0
        %378 = vmatpush1.msra.mxu0 %v302
        %379 = vmatprep.subr.mxu0 0.0
        %380 = vmatpush1.msra.mxu0 %v303
        %381 = vmatprep.subr.mxu0 0.0
        %382 = vmatpush1.msra.mxu0 %v304
        %383 = vmatprep.subr.mxu0 0.0
        %384 = vmatpush1.msra.mxu0 %v305
        %385 = vmatprep.subr.mxu0 0.0
        %386 = vmatpush1.msra.mxu0 %v306
        %387 = vmatprep.subr.mxu0 0.0
        %388 = vmatpush1.msra.mxu0 %v307
        %389 = vmatprep.subr.mxu0 0.0
        %390 = vmatpush1.msra.mxu0 %v308
        %391 = vmatprep.subr.mxu0 0.0
        %392 = vmatpush1.msra.mxu0 %v309
        %393 = vmatprep.subr.mxu0 0.0
        %394 = vmatpush1.msra.mxu0 %v310
        %395 = vmatprep.subr.mxu0 0.0
        %396 = vmatpush1.msra.mxu0 %v311
        %397 = vmatprep.subr.mxu0 0.0
        %398 = vmatpush1.msra.mxu0 %v312
        %399 = vmatprep.subr.mxu0 0.0
        %400 = vmatpush1.msra.mxu0 %v313
        %401 = vmatprep.subr.mxu0 0.0
        %402 = vmatpush1.msra.mxu0 %v314
        %403 = vmatprep.subr.mxu0 0.0
        %404 = vmatpush1.msra.mxu0 %v315
        %405 = vmatprep.subr.mxu0 0.0
        %406 = vmatpush1.msra.mxu0 %v316
        %407 = vmatprep.subr.mxu0 0.0
        %408 = vmatpush1.msra.mxu0 %v317
        %409 = vmatprep.subr.mxu0 0.0
        %410 = vmatpush1.msra.mxu0 %v318
        %411 = vmatprep.subr.mxu0 0.0
        %412 = vmatpush1.msra.mxu0 %v319
        %413 = vmatprep.subr.mxu0 0.0
        %414 = vmatpush1.msra.mxu0 %v320
        %415 = vmatprep.subr.mxu0 0.0
        %416 = vmatpush1.msra.mxu0 %v321
        %417 = vmatprep.subr.mxu0 0.0
        %418 = vmatpush1.msra.mxu0 %v322
        %419 = vmatprep.subr.mxu0 0.0
        %420 = vmatpush1.msra.mxu0 %v323
        %421 = vmatprep.subr.mxu0 0.0
        %422 = vmatpush1.msra.mxu0 %v324
        %423 = vmatprep.subr.mxu0 0.0
        %424 = vmatpush1.msra.mxu0 %v325
        %425 = vmatprep.subr.mxu0 0.0
        %426 = vmatpush1.msra.mxu0 %v326
        %427 = vmatprep.subr.mxu0 0.0
        %428 = vmatpush1.msra.mxu0 %v327
        %429 = vmatprep.subr.mxu0 0.0
        %430 = vmatpush1.msra.mxu0 %v328
        %431 = vmatprep.subr.mxu0 0.0
        %432 = vmatpush1.msra.mxu0 %v329
        %433 = vmatprep.subr.mxu0 0.0
        %434 = vmatpush1.msra.mxu0 %v330
        %435 = vmatprep.mubr.f32.mxu0 %v296
        %436 = vmatmul.mubr.f32.gmra.mrb[0].mxu0 %v295
        %v437 = vpop.f32.mrb[0].mxu0
        %v438 = vadd.f32 0.0, %v437
        %v439 = vpop.f32.mrb[0].mxu0
        %440 = vdwg.mxu0
        %441 = vmatprep.subr.mxu0 0.0
        %442 = vmatpush1.msra.mxu0 %v331
        %443 = vmatprep.subr.mxu0 0.0
        %444 = vmatpush1.msra.mxu0 %v332
        %445 = vmatprep.subr.mxu0 0.0
        %446 = vmatpush1.msra.mxu0 %v333
        %447 = vmatprep.subr.mxu0 0.0
        %448 = vmatpush1.msra.mxu0 %v334
        %449 = vmatprep.subr.mxu0 0.0
        %450 = vmatpush1.msra.mxu0 %v335
        %451 = vmatprep.subr.mxu0 0.0
        %452 = vmatpush1.msra.mxu0 %v336
        %453 = vmatprep.subr.mxu0 0.0
        %454 = vmatpush1.msra.mxu0 %v337
        %455 = vmatprep.subr.mxu0 0.0
        %456 = vmatpush1.msra.mxu0 %v338
        %457 = vmatprep.subr.mxu0 0.0
        %458 = vmatpush1.msra.mxu0 %v339
        %459 = vmatprep.subr.mxu0 0.0
        %460 = vmatpush1.msra.mxu0 %v340
        %461 = vmatprep.subr.mxu0 0.0
        %462 = vmatpush1.msra.mxu0 %v341
        %463 = vmatprep.subr.mxu0 0.0
        %464 = vmatpush1.msra.mxu0 %v342
        %465 = vmatprep.subr.mxu0 0.0
        %466 = vmatpush1.msra.mxu0 %v343
        %467 = vmatprep.subr.mxu0 0.0
        %468 = vmatpush1.msra.mxu0 %v344
        %469 = vmatprep.subr.mxu0 0.0
        %470 = vmatpush1.msra.mxu0 %v345
        %471 = vmatprep.subr.mxu0 0.0
        %472 = vmatpush1.msra.mxu0 %v346
        %473 = vmatprep.subr.mxu0 0.0
        %474 = vmatpush1.msra.mxu0 %v347
        %475 = vmatprep.subr.mxu0 0.0
        %476 = vmatpush1.msra.mxu0 %v348
        %477 = vmatprep.subr.mxu0 0.0
        %478 = vmatpush1.msra.mxu0 %v349
        %479 = vmatprep.subr.mxu0 0.0
        %480 = vmatpush1.msra.mxu0 %v350
        %481 = vmatprep.subr.mxu0 0.0
        %482 = vmatpush1.msra.mxu0 %v351
        %483 = vmatprep.subr.mxu0 0.0
        %484 = vmatpush1.msra.mxu0 %v352
        %485 = vmatprep.subr.mxu0 0.0
        %486 = vmatpush1.msra.mxu0 %v353
        %487 = vmatprep.subr.mxu0 0.0
        %488 = vmatpush1.msra.mxu0 %v354
        %489 = vmatprep.subr.mxu0 0.0
        %490 = vmatpush1.msra.mxu0 %v355
        %491 = vmatprep.subr.mxu0 0.0
        %492 = vmatpush1.msra.mxu0 %v356
        %493 = vmatprep.subr.mxu0 0.0
        %494 = vmatpush1.msra.mxu0 %v357
        %495 = vmatprep.subr.mxu0 0.0
        %496 = vmatpush1.msra.mxu0 %v358
        %497 = vmatprep.subr.mxu0 0.0
        %498 = vmatpush1.msra.mxu0 %v359
        %499 = vmatprep.subr.mxu0 0.0
        %500 = vmatpush1.msra.mxu0 %v360
        %501 = vmatprep.subr.mxu0 0.0
        %502 = vmatpush1.msra.mxu0 %v361
        %503 = vmatprep.subr.mxu0 0.0
        %504 = vmatpush1.msra.mxu0 %v362
        %505 = vmatprep.mubr.f32.mxu0 %v298
        %506 = vmatmul.mubr.f32.gmra.mrb[0].mxu0 %v297
        %v507 = vpop.f32.mrb[0].mxu0
        %v508 = vadd.f32 %v438, %v507
        %v509 = vpop.f32.mrb[0].mxu0
        %510 = vdwg.mxu0
        %v511 = vmul.f32 %v508, 0.03125
        %vm512 = vcmask 130048
        %v514 = vsel %vm512, %v511, 0
        %516 = vmatprep.subr.mxu0 %v364
        %517 = vmatpush1.msra.mxu0 %v363
        %518 = vmatprep.subr.mxu0 %v368
        %519 = vmatpush1.msra.mxu0 %v367
        %520 = vmatprep.subr.mxu0 0.0
        %521 = vmatpush1.msra.mxu0 0.0
        %522 = vmatprep.subr.mxu0 0.0
        %523 = vmatpush1.msra.mxu0 0.0
        %524 = vmatprep.subr.mxu0 0.0
        %525 = vmatpush1.msra.mxu0 0.0
        %526 = vmatprep.subr.mxu0 0.0
        %527 = vmatpush1.msra.mxu0 0.0
        %528 = vmatprep.subr.mxu0 0.0
        %529 = vmatpush1.msra.mxu0 0.0
        %530 = vmatprep.subr.mxu0 0.0
        %531 = vmatpush1.msra.mxu0 0.0
        %532 = vmatprep.subr.mxu0 0.0
        %533 = vmatpush1.msra.mxu0 0.0
        %534 = vmatprep.subr.mxu0 0.0
        %535 = vmatpush1.msra.mxu0 0.0
        %536 = vmatprep.subr.mxu0 0.0
        %537 = vmatpush1.msra.mxu0 0.0
        %538 = vmatprep.subr.mxu0 0.0
        %539 = vmatpush1.msra.mxu0 0.0
        %540 = vmatprep.subr.mxu0 0.0
        %541 = vmatpush1.msra.mxu0 0.0
        %542 = vmatprep.subr.mxu0 0.0
        %543 = vmatpush1.msra.mxu0 0.0
        %544 = vmatprep.subr.mxu0 0.0
        %545 = vmatpush1.msra.mxu0 0.0
        %546 = vmatprep.subr.mxu0 0.0
        %547 = vmatpush1.msra.mxu0 0.0
        %548 = vmatprep.subr.mxu0 0.0
        %549 = vmatpush1.msra.mxu0 0.0
        %550 = vmatprep.subr.mxu0 0.0
        %551 = vmatpush1.msra.mxu0 0.0
        %552 = vmatprep.subr.mxu0 0.0
        %553 = vmatpush1.msra.mxu0 0.0
        %554 = vmatprep.subr.mxu0 0.0
        %555 = vmatpush1.msra.mxu0 0.0
        %556 = vmatprep.subr.mxu0 0.0
        %557 = vmatpush1.msra.mxu0 0.0
        %558 = vmatprep.subr.mxu0 0.0
        %559 = vmatpush1.msra.mxu0 0.0
        %560 = vmatprep.subr.mxu0 0.0
        %561 = vmatpush1.msra.mxu0 0.0
        %562 = vmatprep.subr.mxu0 0.0
        %563 = vmatpush1.msra.mxu0 0.0
        %564 = vmatprep.subr.mxu0 0.0
        %565 = vmatpush1.msra.mxu0 0.0
        %566 = vmatprep.subr.mxu0 0.0
        %567 = vmatpush1.msra.mxu0 0.0
        %568 = vmatprep.subr.mxu0 0.0
        %569 = vmatpush1.msra.mxu0 0.0
        %570 = vmatprep.subr.mxu0 0.0
        %571 = vmatpush1.msra.mxu0 0.0
        %572 = vmatprep.subr.mxu0 0.0
        %573 = vmatpush1.msra.mxu0 0.0
        %574 = vmatprep.subr.mxu0 0.0
        %575 = vmatpush1.msra.mxu0 0.0
        %576 = vmatprep.subr.mxu0 0.0
        %577 = vmatpush1.msra.mxu0 0.0
        %578 = vmatprep.subr.mxu0 0.0
        %579 = vmatpush1.msra.mxu0 0.0
        %580 = vmatprep.mubr.f32.mxu0 0.0
        %581 = vmatmul.mubr.f32.gmra.mrb[0].mxu0 %v514
        %v582 = vpop.f32.mrb[0].mxu0
        %v583 = vadd.f32 0.0, %v582
        %v584 = vpop.f32.mrb[0].mxu0
        %v585 = vadd.f32 0.0, %v584
        %586 = vdwg.mxu0
        %587 = vmatprep.subr.mxu0 %v366
        %588 = vmatpush1.msra.mxu0 %v365
        %589 = vmatprep.subr.mxu0 %v370
        %590 = vmatpush1.msra.mxu0 %v369
        %591 = vmatprep.subr.mxu0 0.0
        %592 = vmatpush1.msra.mxu0 0.0
        %593 = vmatprep.subr.mxu0 0.0
        %594 = vmatpush1.msra.mxu0 0.0
        %595 = vmatprep.subr.mxu0 0.0
        %596 = vmatpush1.msra.mxu0 0.0
        %597 = vmatprep.subr.mxu0 0.0
        %598 = vmatpush1.msra.mxu0 0.0
        %599 = vmatprep.subr.mxu0 0.0
        %600 = vmatpush1.msra.mxu0 0.0
        %601 = vmatprep.subr.mxu0 0.0
        %602 = vmatpush1.msra.mxu0 0.0
        %603 = vmatprep.subr.mxu0 0.0
        %604 = vmatpush1.msra.mxu0 0.0
        %605 = vmatprep.subr.mxu0 0.0
        %606 = vmatpush1.msra.mxu0 0.0
        %607 = vmatprep.subr.mxu0 0.0
        %608 = vmatpush1.msra.mxu0 0.0
        %609 = vmatprep.subr.mxu0 0.0
        %610 = vmatpush1.msra.mxu0 0.0
        %611 = vmatprep.subr.mxu0 0.0
        %612 = vmatpush1.msra.mxu0 0.0
        %613 = vmatprep.subr.mxu0 0.0
        %614 = vmatpush1.msra.mxu0 0.0
        %615 = vmatprep.subr.mxu0 0.0
        %616 = vmatpush1.msra.mxu0 0.0
        %617 = vmatprep.subr.mxu0 0.0
        %618 = vmatpush1.msra.mxu0 0.0
        %619 = vmatprep.subr.mxu0 0.0
        %620 = vmatpush1.msra.mxu0 0.0
        %621 = vmatprep.subr.mxu0 0.0
        %622 = vmatpush1.msra.mxu0 0.0
        %623 = vmatprep.subr.mxu0 0.0
        %624 = vmatpush1.msra.mxu0 0.0
        %625 = vmatprep.subr.mxu0 0.0
        %626 = vmatpush1.msra.mxu0 0.0
        %627 = vmatprep.subr.mxu0 0.0
        %628 = vmatpush1.msra.mxu0 0.0
        %629 = vmatprep.subr.mxu0 0.0
        %630 = vmatpush1.msra.mxu0 0.0
        %631 = vmatprep.subr.mxu0 0.0
        %632 = vmatpush1.msra.mxu0 0.0
        %633 = vmatprep.subr.mxu0 0.0
        %634 = vmatpush1.msra.mxu0 0.0
        %635 = vmatprep.subr.mxu0 0.0
        %636 = vmatpush1.msra.mxu0 0.0
        %637 = vmatprep.subr.mxu0 0.0
        %638 = vmatpush1.msra.mxu0 0.0
        %639 = vmatprep.subr.mxu0 0.0
        %640 = vmatpush1.msra.mxu0 0.0
        %641 = vmatprep.subr.mxu0 0.0
        %642 = vmatpush1.msra.mxu0 0.0
        %643 = vmatprep.subr.mxu0 0.0
        %644 = vmatpush1.msra.mxu0 0.0
        %645 = vmatprep.subr.mxu0 0.0
        %646 = vmatpush1.msra.mxu0 0.0
        %647 = vmatprep.subr.mxu0 0.0
        %648 = vmatpush1.msra.mxu0 0.0
        %649 = vmatprep.subr.mxu0 0.0
        %650 = vmatpush1.msra.mxu0 0.0
        %651 = vmatprep.mubr.f32.mxu0 0.0
        %652 = vmatmul.mubr.f32.gmra.mrb[0].mxu0 %v514
        %v653 = vpop.f32.mrb[0].mxu0
        %v654 = vadd.f32 0.0, %v653
        %v655 = vpop.f32.mrb[0].mxu0
        %v656 = vadd.f32 0.0, %v655
        %657 = vdwg.mxu0
        %v658 = vsub.f32 %v295, %v583
        %v659 = vsub.f32 %v296, %v585
        %v660 = vsub.f32 %v297, %v654
        %v661 = vsub.f32 %v298, %v656
        %v662 = vmul.f32 %v658, %v658
        %v663 = vmul.f32 %v659, %v659
        %v664 = vmul.f32 %v660, %v660
        %v665 = vmul.f32 %v661, %v661
        %666 = vmatprep.subr.mxu0 0.0
        %667 = vmatpush1.msra.mxu0 %v299
        %668 = vmatprep.subr.mxu0 0.0
        %669 = vmatpush1.msra.mxu0 %v300
        %670 = vmatprep.subr.mxu0 0.0
        %671 = vmatpush1.msra.mxu0 %v301
        %672 = vmatprep.subr.mxu0 0.0
        %673 = vmatpush1.msra.mxu0 %v302
        %674 = vmatprep.subr.mxu0 0.0
        %675 = vmatpush1.msra.mxu0 %v303
        %676 = vmatprep.subr.mxu0 0.0
        %677 = vmatpush1.msra.mxu0 %v304
        %678 = vmatprep.subr.mxu0 0.0
        %679 = vmatpush1.msra.mxu0 %v305
        %680 = vmatprep.subr.mxu0 0.0
        %681 = vmatpush1.msra.mxu0 %v306
        %682 = vmatprep.subr.mxu0 0.0
        %683 = vmatpush1.msra.mxu0 %v307
        %684 = vmatprep.subr.mxu0 0.0
        %685 = vmatpush1.msra.mxu0 %v308
        %686 = vmatprep.subr.mxu0 0.0
        %687 = vmatpush1.msra.mxu0 %v309
        %688 = vmatprep.subr.mxu0 0.0
        %689 = vmatpush1.msra.mxu0 %v310
        %690 = vmatprep.subr.mxu0 0.0
        %691 = vmatpush1.msra.mxu0 %v311
        %692 = vmatprep.subr.mxu0 0.0
        %693 = vmatpush1.msra.mxu0 %v312
        %694 = vmatprep.subr.mxu0 0.0
        %695 = vmatpush1.msra.mxu0 %v313
        %696 = vmatprep.subr.mxu0 0.0
        %697 = vmatpush1.msra.mxu0 %v314
        %698 = vmatprep.subr.mxu0 0.0
        %699 = vmatpush1.msra.mxu0 %v315
        %700 = vmatprep.subr.mxu0 0.0
        %701 = vmatpush1.msra.mxu0 %v316
        %702 = vmatprep.subr.mxu0 0.0
        %703 = vmatpush1.msra.mxu0 %v317
        %704 = vmatprep.subr.mxu0 0.0
        %705 = vmatpush1.msra.mxu0 %v318
        %706 = vmatprep.subr.mxu0 0.0
        %707 = vmatpush1.msra.mxu0 %v319
        %708 = vmatprep.subr.mxu0 0.0
        %709 = vmatpush1.msra.mxu0 %v320
        %710 = vmatprep.subr.mxu0 0.0
        %711 = vmatpush1.msra.mxu0 %v321
        %712 = vmatprep.subr.mxu0 0.0
        %713 = vmatpush1.msra.mxu0 %v322
        %714 = vmatprep.subr.mxu0 0.0
        %715 = vmatpush1.msra.mxu0 %v323
        %716 = vmatprep.subr.mxu0 0.0
        %717 = vmatpush1.msra.mxu0 %v324
        %718 = vmatprep.subr.mxu0 0.0
        %719 = vmatpush1.msra.mxu0 %v325
        %720 = vmatprep.subr.mxu0 0.0
        %721 = vmatpush1.msra.mxu0 %v326
        %722 = vmatprep.subr.mxu0 0.0
        %723 = vmatpush1.msra.mxu0 %v327
        %724 = vmatprep.subr.mxu0 0.0
        %725 = vmatpush1.msra.mxu0 %v328
        %726 = vmatprep.subr.mxu0 0.0
        %727 = vmatpush1.msra.mxu0 %v329
        %728 = vmatprep.subr.mxu0 0.0
        %729 = vmatpush1.msra.mxu0 %v330
        %730 = vmatprep.mubr.f32.mxu0 %v663
        %731 = vmatmul.mubr.f32.gmra.mrb[0].mxu0 %v662
        %v732 = vpop.f32.mrb[0].mxu0
        %v733 = vadd.f32 0.0, %v732
        %v734 = vpop.f32.mrb[0].mxu0
        %735 = vdwg.mxu0
        %736 = vmatprep.subr.mxu0 0.0
        %737 = vmatpush1.msra.mxu0 %v331
        %738 = vmatprep.subr.mxu0 0.0
        %739 = vmatpush1.msra.mxu0 %v332
        %740 = vmatprep.subr.mxu0 0.0
        %741 = vmatpush1.msra.mxu0 %v333
        %742 = vmatprep.subr.mxu0 0.0
        %743 = vmatpush1.msra.mxu0 %v334
        %744 = vmatprep.subr.mxu0 0.0
        %745 = vmatpush1.msra.mxu0 %v335
        %746 = vmatprep.subr.mxu0 0.0
        %747 = vmatpush1.msra.mxu0 %v336
        %748 = vmatprep.subr.mxu0 0.0
        %749 = vmatpush1.msra.mxu0 %v337
        %750 = vmatprep.subr.mxu0 0.0
        %751 = vmatpush1.msra.mxu0 %v338
        %752 = vmatprep.subr.mxu0 0.0
        %753 = vmatpush1.msra.mxu0 %v339
        %754 = vmatprep.subr.mxu0 0.0
        %755 = vmatpush1.msra.mxu0 %v340
        %756 = vmatprep.subr.mxu0 0.0
        %757 = vmatpush1.msra.mxu0 %v341
        %758 = vmatprep.subr.mxu0 0.0
        %759 = vmatpush1.msra.mxu0 %v342
        %760 = vmatprep.subr.mxu0 0.0
        %761 = vmatpush1.msra.mxu0 %v343
        %762 = vmatprep.subr.mxu0 0.0
        %763 = vmatpush1.msra.mxu0 %v344
        %764 = vmatprep.subr.mxu0 0.0
        %765 = vmatpush1.msra.mxu0 %v345
        %766 = vmatprep.subr.mxu0 0.0
        %767 = vmatpush1.msra.mxu0 %v346
        %768 = vmatprep.subr.mxu0 0.0
        %769 = vmatpush1.msra.mxu0 %v347
        %770 = vmatprep.subr.mxu0 0.0
        %771 = vmatpush1.msra.mxu0 %v348
        %772 = vmatprep.subr.mxu0 0.0
        %773 = vmatpush1.msra.mxu0 %v349
        %774 = vmatprep.subr.mxu0 0.0
        %775 = vmatpush1.msra.mxu0 %v350
        %776 = vmatprep.subr.mxu0 0.0
        %777 = vmatpush1.msra.mxu0 %v351
        %778 = vmatprep.subr.mxu0 0.0
        %779 = vmatpush1.msra.mxu0 %v352
        %780 = vmatprep.subr.mxu0 0.0
        %781 = vmatpush1.msra.mxu0 %v353
        %782 = vmatprep.subr.mxu0 0.0
        %783 = vmatpush1.msra.mxu0 %v354
        %784 = vmatprep.subr.mxu0 0.0
        %785 = vmatpush1.msra.mxu0 %v355
        %786 = vmatprep.subr.mxu0 0.0
        %787 = vmatpush1.msra.mxu0 %v356
        %788 = vmatprep.subr.mxu0 0.0
        %789 = vmatpush1.msra.mxu0 %v357
        %790 = vmatprep.subr.mxu0 0.0
        %791 = vmatpush1.msra.mxu0 %v358
        %792 = vmatprep.subr.mxu0 0.0
        %793 = vmatpush1.msra.mxu0 %v359
        %794 = vmatprep.subr.mxu0 0.0
        %795 = vmatpush1.msra.mxu0 %v360
        %796 = vmatprep.subr.mxu0 0.0
        %797 = vmatpush1.msra.mxu0 %v361
        %798 = vmatprep.subr.mxu0 0.0
        %799 = vmatpush1.msra.mxu0 %v362
        %800 = vmatprep.mubr.f32.mxu0 %v665
        %801 = vmatmul.mubr.f32.gmra.mrb[0].mxu0 %v664
        %v802 = vpop.f32.mrb[0].mxu0
        %v803 = vadd.f32 %v733, %v802
        %v804 = vpop.f32.mrb[0].mxu0
        %805 = vdwg.mxu0
        %v806 = vmul.f32 %v803, 0.03125
        %v807 = vadd.f32 %v806, 1e-05
        %v808 = vrsqrt.pop %v807
        %v810 = vsel %vm512, %v808, 0
        %812 = vmatprep.subr.mxu0 %v364
        %813 = vmatpush1.msra.mxu0 %v363
        %814 = vmatprep.subr.mxu0 %v368
        %815 = vmatpush1.msra.mxu0 %v367
        %816 = vmatprep.subr.mxu0 0.0
        %817 = vmatpush1.msra.mxu0 0.0
        %818 = vmatprep.subr.mxu0 0.0
        %819 = vmatpush1.msra.mxu0 0.0
        %820 = vmatprep.subr.mxu0 0.0
        %821 = vmatpush1.msra.mxu0 0.0
        %822 = vmatprep.subr.mxu0 0.0
        %823 = vmatpush1.msra.mxu0 0.0
        %824 = vmatprep.subr.mxu0 0.0
        %825 = vmatpush1.msra.mxu0 0.0
        %826 = vmatprep.subr.mxu0 0.0
        %827 = vmatpush1.msra.mxu0 0.0
        %828 = vmatprep.subr.mxu0 0.0
        %829 = vmatpush1.msra.mxu0 0.0
        %830 = vmatprep.subr.mxu0 0.0
        %831 = vmatpush1.msra.mxu0 0.0
        %832 = vmatprep.subr.mxu0 0.0
        %833 = vmatpush1.msra.mxu0 0.0
        %834 = vmatprep.subr.mxu0 0.0
        %835 = vmatpush1.msra.mxu0 0.0
        %836 = vmatprep.subr.mxu0 0.0
        %837 = vmatpush1.msra.mxu0 0.0
        %838 = vmatprep.subr.mxu0 0.0
        %839 = vmatpush1.msra.mxu0 0.0
        %840 = vmatprep.subr.mxu0 0.0
        %841 = vmatpush1.msra.mxu0 0.0
        %842 = vmatprep.subr.mxu0 0.0
        %843 = vmatpush1.msra.mxu0 0.0
        %844 = vmatprep.subr.mxu0 0.0
        %845 = vmatpush1.msra.mxu0 0.0
        %846 = vmatprep.subr.mxu0 0.0
        %847 = vmatpush1.msra.mxu0 0.0
        %848 = vmatprep.subr.mxu0 0.0
        %849 = vmatpush1.msra.mxu0 0.0
        %850 = vmatprep.subr.mxu0 0.0
        %851 = vmatpush1.msra.mxu0 0.0
        %852 = vmatprep.subr.mxu0 0.0
        %853 = vmatpush1.msra.mxu0 0.0
        %854 = vmatprep.subr.mxu0 0.0
        %855 = vmatpush1.msra.mxu0 0.0
        %856 = vmatprep.subr.mxu0 0.0
        %857 = vmatpush1.msra.mxu0 0.0
        %858 = vmatprep.subr.mxu0 0.0
        %859 = vmatpush1.msra.mxu0 0.0
        %860 = vmatprep.subr.mxu0 0.0
        %861 = vmatpush1.msra.mxu0 0.0
        %862 = vmatprep.subr.mxu0 0.0
        %863 = vmatpush1.msra.mxu0 0.0
        %864 = vmatprep.subr.mxu0 0.0
        %865 = vmatpush1.msra.mxu0 0.0
        %866 = vmatprep.subr.mxu0 0.0
        %867 = vmatpush1.msra.mxu0 0.0
        %868 = vmatprep.subr.mxu0 0.0
        %869 = vmatpush1.msra.mxu0 0.0
        %870 = vmatprep.subr.mxu0 0.0
        %871 = vmatpush1.msra.mxu0 0.0
        %872 = vmatprep.subr.mxu0 0.0
        %873 = vmatpush1.msra.mxu0 0.0
        %874 = vmatprep.subr.mxu0 0.0
        %875 = vmatpush1.msra.mxu0 0.0
        %876 = vmatprep.mubr.f32.mxu0 0.0
        %877 = vmatmul.mubr.f32.gmra.mrb[0].mxu0 %v810
        %v878 = vpop.f32.mrb[0].mxu0
        %v879 = vadd.f32 0.0, %v878
        %v880 = vpop.f32.mrb[0].mxu0
        %v881 = vadd.f32 0.0, %v880
        %882 = vdwg.mxu0
        %883 = vmatprep.subr.mxu0 %v366
        %884 = vmatpush1.msra.mxu0 %v365
        %885 = vmatprep.subr.mxu0 %v370
        %886 = vmatpush1.msra.mxu0 %v369
        %887 = vmatprep.subr.mxu0 0.0
        %888 = vmatpush1.msra.mxu0 0.0
        %889 = vmatprep.subr.mxu0 0.0
        %890 = vmatpush1.msra.mxu0 0.0
        %891 = vmatprep.subr.mxu0 0.0
        %892 = vmatpush1.msra.mxu0 0.0
        %893 = vmatprep.subr.mxu0 0.0
        %894 = vmatpush1.msra.mxu0 0.0
        %895 = vmatprep.subr.mxu0 0.0
        %896 = vmatpush1.msra.mxu0 0.0
        %897 = vmatprep.subr.mxu0 0.0
        %898 = vmatpush1.msra.mxu0 0.0
        %899 = vmatprep.subr.mxu0 0.0
        %900 = vmatpush1.msra.mxu0 0.0
        %901 = vmatprep.subr.mxu0 0.0
        %902 = vmatpush1.msra.mxu0 0.0
        %903 = vmatprep.subr.mxu0 0.0
        %904 = vmatpush1.msra.mxu0 0.0
        %905 = vmatprep.subr.mxu0 0.0
        %906 = vmatpush1.msra.mxu0 0.0
        %907 = vmatprep.subr.mxu0 0.0
        %908 = vmatpush1.msra.mxu0 0.0
        %909 = vmatprep.subr.mxu0 0.0
        %910 = vmatpush1.msra.mxu0 0.0
        %911 = vmatprep.subr.mxu0 0.0
        %912 = vmatpush1.msra.mxu0 0.0
        %913 = vmatprep.subr.mxu0 0.0
        %914 = vmatpush1.msra.mxu0 0.0
        %915 = vmatprep.subr.mxu0 0.0
        %916 = vmatpush1.msra.mxu0 0.0
        %917 = vmatprep.subr.mxu0 0.0
        %918 = vmatpush1.msra.mxu0 0.0
        %919 = vmatprep.subr.mxu0 0.0
        %920 = vmatpush1.msra.mxu0 0.0
        %921 = vmatprep.subr.mxu0 0.0
        %922 = vmatpush1.msra.mxu0 0.0
        %923 = vmatprep.subr.mxu0 0.0
        %924 = vmatpush1.msra.mxu0 0.0
        %925 = vmatprep.subr.mxu0 0.0
        %926 = vmatpush1.msra.mxu0 0.0
        %927 = vmatprep.subr.mxu0 0.0
        %928 = vmatpush1.msra.mxu0 0.0
        %929 = vmatprep.subr.mxu0 0.0
        %930 = vmatpush1.msra.mxu0 0.0
        %931 = vmatprep.subr.mxu0 0.0
        %932 = vmatpush1.msra.mxu0 0.0
        %933 = vmatprep.subr.mxu0 0.0
        %934 = vmatpush1.msra.mxu0 0.0
        %935 = vmatprep.subr.mxu0 0.0
        %936 = vmatpush1.msra.mxu0 0.0
        %937 = vmatprep.subr.mxu0 0.0
        %938 = vmatpush1.msra.mxu0 0.0
        %939 = vmatprep.subr.mxu0 0.0
        %940 = vmatpush1.msra.mxu0 0.0
        %941 = vmatprep.subr.mxu0 0.0
        %942 = vmatpush1.msra.mxu0 0.0
        %943 = vmatprep.subr.mxu0 0.0
        %944 = vmatpush1.msra.mxu0 0.0
        %945 = vmatprep.subr.mxu0 0.0
        %946 = vmatpush1.msra.mxu0 0.0
        %947 = vmatprep.mubr.f32.mxu0 0.0
        %948 = vmatmul.mubr.f32.gmra.mrb[0].mxu0 %v810
        %v949 = vpop.f32.mrb[0].mxu0
        %v950 = vadd.f32 0.0, %v949
        %v951 = vpop.f32.mrb[0].mxu0
        %v952 = vadd.f32 0.0, %v951
        %953 = vdwg.mxu0
        %v954 = vmul.f32 %v658, %v879
        %v955 = vmul.f32 %v659, %v881
        %v956 = vmul.f32 %v660, %v950
        %v957 = vmul.f32 %v661, %v952
        %v958 = vld [vmem:[#allocation5] sm:$0xf]
        %v960 = vlaneseq
        %v961 = vshrl.u32 %v960, 7
        %v962 = vsub.s32 0, %v961
        %v963 = vrot.slane %v958, %v962
        %v964 = vlaneseq
        %v965 = vshrl.u32 %v964, 7
        %v966 = vsub.s32 1, %v965
        %v967 = vrot.slane %v958, %v966
        %v968 = vlaneseq
        %v969 = vshrl.u32 %v968, 7
        %v970 = vsub.s32 2, %v969
        %v971 = vrot.slane %v958, %v970
        %v972 = vlaneseq
        %v973 = vshrl.u32 %v972, 7
        %v974 = vsub.s32 3, %v973
        %v975 = vrot.slane %v958, %v974
        %v980 = vmul.f32 %v954, %v963
        %v981 = vmul.f32 %v955, %v967
        %v982 = vmul.f32 %v956, %v971
        %v983 = vmul.f32 %v957, %v975
        %v984 = vld [vmem:[#allocation7] sm:$0xf]
        %v986 = vlaneseq
        %v987 = vshrl.u32 %v986, 7
        %v988 = vsub.s32 0, %v987
        %v989 = vrot.slane %v984, %v988
        %v990 = vlaneseq
        %v991 = vshrl.u32 %v990, 7
        %v992 = vsub.s32 1, %v991
        %v993 = vrot.slane %v984, %v992
        %v994 = vlaneseq
        %v995 = vshrl.u32 %v994, 7
        %v996 = vsub.s32 2, %v995
        %v997 = vrot.slane %v984, %v996
        %v998 = vlaneseq
        %v999 = vshrl.u32 %v998, 7
        %v1000 = vsub.s32 3, %v999
        %v1001 = vrot.slane %v984, %v1000
        %v1006 = vadd.f32 %v980, %v989
        %v1007 = vadd.f32 %v981, %v993
        %v1008 = vadd.f32 %v982, %v997
        %v1009 = vadd.f32 %v983, %v1001
        %1010 = vst [vmem:[%s294] sm:$0xff] %v1006
        %1011 = vst [vmem:[%s294 + $0x8] sm:$0xff] %v1007
        %1012 = vst [vmem:[%s294 + $0x10] sm:$0xff] %v1008
        %1013 = vst [vmem:[%s294 + $0x18] sm:$0xff] %v1009
        %s1014 = sand.u32 %s142, 1
        %s1015 = scalar_lea.sflag [#allocation4], %s1014
        %s1016 = sand.u32 %s142, 1
        %s1017 = smul.addr %s1016, 32
        %s1018 = scalar_lea.vmem [#allocation11], %s1017
        // Predicated region
        $region61: #{withbias_layernorm.1} parent=39 // pred_check
          %p1019 = pneg %p152
        $region62: #{withbias_layernorm.1} parent=39 // pred_check_branch
          %1021 = sbr.rel (%p1019) target = $region64
        $region63: #{withbias_layernorm.1} parent=39 // pred_region
          %s1023 = ssub.s32 512, 512
          %1024 = vsyncadd %s1015, %s1023
          %s1025 = smul.addr %s24, 4
          %s1026 = smul.addr %s1025, 128
          %s1027 = scalar_lea.hbm %s5, %s1026
          %s1029 = sshll.u32 %s1018, 4
          %s1030 = int_to_ptr.vmem [resolvable:$true] %s1029
          %1032 = dma.vmem_to_hbm [thread:$0]  %s1030, 512, %s1027, %s1015
        $region64: #{withbias_layernorm.1} parent=39 // pred_fallthru
          _
      $region40: #{withbias_layernorm.1} parent=5 // pred_fallthru
        _
      %p1033 = scmp.le.s32.totalorder 2, %s19
      // Predicated region
      $region65: #{withbias_layernorm.1} parent=5 // pred_check
        %p1034 = pneg %p1033
      $region66: #{withbias_layernorm.1} parent=5 // pred_check_branch
        %1036 = sbr.rel (%p1034) target = $region68
      $region67: #{withbias_layernorm.1} parent=5 // pred_region
        %s1037 = ssub.s32 %s19, 2
        // Predicated region
        $region69: #{withbias_layernorm.1} parent=67 // pred_check
          %p1038 = pneg %p158
        $region70: #{withbias_layernorm.1} parent=67 // pred_check_branch
          %1040 = sbr.rel (%p1038) target = $region72
        $region71: #{withbias_layernorm.1} parent=67 // pred_region
          %s1041 = sand.u32 %s143, 1
          %s1042 = scalar_lea.sflag [#allocation4], %s1041
          %s1043 = sand.u32 %s143, 1
          %s1044 = smul.addr %s1043, 32
          %s1045 = scalar_lea.vmem [#allocation11], %s1044
          %1046 = dma.done %s1042, 512
        $region72: #{withbias_layernorm.1} parent=67 // pred_fallthru
          _
      $region68: #{withbias_layernorm.1} parent=5 // pred_fallthru
        _
    $region6: #{withbias_layernorm.1} parent=1 // loop_footer
      %s23 = sadd.s32 1, %s19
    $region7: #{withbias_layernorm.1} parent=1 // loop_footer_branch
      %18 = sbr.rel target = $region3
    $region8: #{withbias_layernorm.1} parent=1 // loop_exit
      _
    %1047 = vsyncpa [#allocation3], 1
    %s1048 = scalar_lea.sflag [#allocation3], 1
    %1049 = vsyncpa %s1048, 1
    %1050 = vsyncpa [#allocation6], 1
    %1051 = vsyncpa [#allocation9], 1
    %1052 = vsyncpa [#allocation4], 1
    %s1053 = scalar_lea.sflag [#allocation4], 1
    %1054 = vsyncpa %s1053, 1

</llo_original>
